<compile_context>
chip_gen: v6e
topology: v6e:2x2x1
jax: 0.10.0
libtpu: 0.0.40
codegen_flags: <defaults>
</compile_context>

<pallas_src>
import functools

import jax
import jax.numpy as jnp
from jax.experimental import pallas as pl
from jax.experimental.pallas import tpu as pltpu

LANE = 128
SUBLANE_BF16 = 16          # bf16 sublane-packing granularity for the batch tile
MXU_ROW = 256              # preferred multi-step tile granularity (MXU rows)
SINGLE_STEP_MAX = 2048     # collapse to one grid step up to this padded batch
TM_CAP = 4096              # tile cap: fits v7x's 64 MiB VMEM with headroom
VMEM_LIMIT_BYTES = 48 * 1024 * 1024


def _round_up(x, m):
    return ((x + m - 1) // m) * m


def dqn_kernel(x_ref, w1_ref, b1_ref, w2_ref, b2_ref, w3_ref, b3_ref, o_ref):
    # Layer 1: bf16 MXU matmul, f32 accumulation; elementwise kept in f32.
    h1 = jnp.dot(x_ref[...], w1_ref[...], preferred_element_type=jnp.float32)
    h1 = jnp.maximum(h1 + b1_ref[...], 0.0)
    # Layer 2
    h2 = jnp.dot(h1.astype(w2_ref.dtype), w2_ref[...],
                 preferred_element_type=jnp.float32)
    h2 = jnp.maximum(h2 + b2_ref[...], 0.0)
    # Layer 3 (output dim lane-padded to 128 with zero columns)
    out = jnp.dot(h2.astype(w3_ref.dtype), w3_ref[...],
                  preferred_element_type=jnp.float32) + b3_ref[...]
    o_ref[...] = out.astype(o_ref.dtype)


def prepare_params(params, compute_dtype=jnp.bfloat16):
    """One-time (per param-update) preparation, hoisted out of the forward.

    Returns (w1c, b1c, w2c, b2c, w3p, b3p): bf16 weights pre-transposed as
    (in, out), f32 biases shaped (1, out), output layer lane-padded to 128.
    """
    w1, b1, w2, b2, w3, b3 = params
    h2, n_actions = w3.shape
    n_out_p = max(LANE, _round_up(n_actions, LANE))
    w3p = jnp.zeros((h2, n_out_p), compute_dtype).at[:, :n_actions].set(
        w3.astype(compute_dtype))
    b3p = jnp.zeros((1, n_out_p), jnp.float32).at[:, :n_actions].set(
        jnp.reshape(b3, (1, n_actions)).astype(jnp.float32))
    return (w1.astype(compute_dtype),
            jnp.reshape(b1, (1, -1)).astype(jnp.float32),
            w2.astype(compute_dtype),
            jnp.reshape(b2, (1, -1)).astype(jnp.float32),
            w3p, b3p)


def _choose_tm(batch, tm):
    """Pick the batch tile (per-grid-step rows)."""
    bp = _round_up(max(batch, SUBLANE_BF16), SUBLANE_BF16)
    if tm is not None:
        tm = _round_up(max(int(tm), SUBLANE_BF16), SUBLANE_BF16)
        return min(tm, bp)
    if bp <= SINGLE_STEP_MAX:
        return bp  # single grid step: no per-step pipeline overhead at all
    # Large batch: at least 2 steps (both v7x TensorCores engage on the
    # "parallel" axis), tiles snapped to MXU rows and capped for v7x VMEM.
    return min(TM_CAP, _round_up(pl.cdiv(bp, 2), MXU_ROW))


@functools.partial(jax.jit, static_argnames=("n_actions", "tm"))
def deep_q_network(state, prepared, *, n_actions, tm=None):
    """Fused 3-layer MLP forward. `prepared` comes from prepare_params()."""
    w1c, b1c, w2c, b2c, w3p, b3p = prepared
    batch, n_inputs = state.shape
    h1 = w1c.shape[1]
    h2 = w2c.shape[1]
    n_out_p = w3p.shape[1]
    cdt = w1c.dtype

    tm = _choose_tm(batch, tm)
    batch_p = _round_up(max(batch, tm), tm)
    x = state.astype(cdt)
    if batch_p != batch:
        x = jnp.pad(x, ((0, batch_p - batch), (0, 0)))
    grid = (batch_p // tm,)

    # Advisory cost estimate so XLA schedules surrounding ops sensibly.
    flops = 2 * batch_p * (n_inputs * h1 + h1 * h2 + h2 * n_out_p)
    bytes_accessed = (
        batch_p * n_inputs * 2                           # bf16 state in
        + (n_inputs * h1 + h1 * h2 + h2 * n_out_p) * 2   # bf16 weights
        + (h1 + h2 + n_out_p) * 4                        # f32 biases
        + batch_p * n_out_p * 2                          # bf16 out
    )
    cost = pl.CostEstimate(flops=flops, transcendentals=0,
                           bytes_accessed=bytes_accessed)

    stream = lambda i: (i, 0)     # batch-streamed arrays
    resident = lambda i: (0, 0)   # weights/biases: same block every step

    out = pl.pallas_call(
        dqn_kernel,
        out_shape=jax.ShapeDtypeStruct((batch_p, n_out_p), jnp.bfloat16),
        grid_spec=pltpu.PrefetchScalarGridSpec(
            num_scalar_prefetch=0,
            grid=grid,
            in_specs=[
                pl.BlockSpec((tm, n_inputs), stream),
                pl.BlockSpec((n_inputs, h1), resident),
                pl.BlockSpec((1, h1), resident),
                pl.BlockSpec((h1, h2), resident),
                pl.BlockSpec((1, h2), resident),
                pl.BlockSpec((h2, n_out_p), resident),
                pl.BlockSpec((1, n_out_p), resident),
            ],
            out_specs=pl.BlockSpec((tm, n_out_p), stream),
        ),
        compiler_params=pltpu.CompilerParams(
            dimension_semantics=("parallel",),     # v7x: shard batch over 2 TCs
            vmem_limit_bytes=VMEM_LIMIT_BYTES),    # explicit cap, v7x-safe
        cost_estimate=cost,
    )(x, w1c, b1c, w2c, b2c, w3p, b3p)

    return out[:batch, :n_actions].astype(state.dtype)


def init_params(key, n_inputs, n_actions, h1=256, h2=256, dtype=jnp.float32):
    """PyTorch nn.Linear-style init (U[-1/sqrt(fan_in), 1/sqrt(fan_in)]).

    Weights are returned already transposed to (in, out); biases are (1, out).
    """
    def linear(k, fan_in, fan_out):
        kw, kb = jax.random.split(k)
        bound = 1.0 / jnp.sqrt(jnp.asarray(fan_in, dtype))
        w = jax.random.uniform(kw, (fan_in, fan_out), dtype, -bound, bound)
        b = jax.random.uniform(kb, (1, fan_out), dtype, -bound, bound)
        return w, b

    k1, k2, k3 = jax.random.split(key, 3)
    w1, b1 = linear(k1, n_inputs, h1)
    w2, b2 = linear(k2, h1, h2)
    w3, b3 = linear(k3, h2, n_actions)
    return (w1, b1, w2, b2, w3, b3)


def reference_forward(state, params, compute_dtype=jnp.float32):
    """Pure-JAX reference (optionally mimicking the bf16 matmul inputs)."""
    w1, b1, w2, b2, w3, b3 = params
    c = lambda a: a.astype(compute_dtype)
    h = jnp.maximum(
        jnp.dot(c(state), c(w1), preferred_element_type=jnp.float32) + b1, 0.0)
    h = jnp.maximum(
        jnp.dot(c(h), c(w2), preferred_element_type=jnp.float32) + b2, 0.0)
    return jnp.dot(c(h), c(w3), preferred_element_type=jnp.float32) + b3


if __name__ == "__main__":
    key = jax.random.PRNGKey(0)
    # Small shapes consistent with the module: n_inputs=16, n_actions=8,
    # h1=h2=256, batch=200.
    batch, n_inputs, n_actions = 200, 16, 8

    k_params, k_state = jax.random.split(key)
    params = init_params(k_params, n_inputs, n_actions, h1=256, h2=256)
    state = jax.random.normal(k_state, (batch, n_inputs), jnp.float32)

    # One-time parameter prep (hoisted out of the jitted forward path).
    prepared = prepare_params(params)

    # Default tiling: single grid step (batch padded 200 -> 208), grid=(1,).
    actions = deep_q_network(state, prepared, n_actions=n_actions)
    jax.block_until_ready(actions)
    assert actions.shape == (batch, n_actions)

    # Forced small tile: exercises the multi-step streamed/pipelined path
    # (tm=64, batch padded to 256, grid=(4,)).
    actions_tiled = deep_q_network(state, prepared, n_actions=n_actions, tm=64)
    jax.block_until_ready(actions_tiled)
    assert actions_tiled.shape == (batch, n_actions)

    # Tight check vs a reference that mimics the bf16 matmul inputs
    # (tolerance widened slightly for the bf16 output store), plus a loose
    # check vs the pure-f32 (PyTorch-semantics) reference.
    ref_bf16 = reference_forward(state, params, compute_dtype=jnp.bfloat16)
    ref_f32 = reference_forward(state, params, compute_dtype=jnp.float32)
    for a in (actions, actions_tiled):
        assert jnp.allclose(a, ref_bf16, atol=1e-2, rtol=1e-2)
        assert jnp.allclose(a, ref_f32, atol=5e-2, rtol=5e-2)
    print("KERNEL_OK")
</pallas_src>

<mosaic_0001>
module attributes {stable_mosaic.version = 11 : i64} {
  func.func @dqn_kernel(%arg0: i32, %arg1: memref<208x16xbf16, #tpu.memory_space<vmem>>, %arg2: memref<16x256xbf16, #tpu.memory_space<vmem>>, %arg3: memref<1x256xf32, #tpu.memory_space<vmem>>, %arg4: memref<256x256xbf16, #tpu.memory_space<vmem>>, %arg5: memref<1x256xf32, #tpu.memory_space<vmem>>, %arg6: memref<256x128xbf16, #tpu.memory_space<vmem>>, %arg7: memref<1x128xf32, #tpu.memory_space<vmem>>, %arg8: memref<208x128xbf16, #tpu.memory_space<vmem>>) attributes {dimension_semantics = [#tpu.dimension_semantics<parallel>], iteration_bounds = array<i64: 1>, scalar_prefetch = 0 : i64, scratch_operands = 0 : i64, tpu.core_type = #tpu.core_type<tc>, window_params = [{transform_indices = @transform_0, window_bounds = array<i64: 208, 16>}, {pipeline_mode = #tpu.pipeline_mode<synchronous>, transform_indices = @transform_1, window_bounds = array<i64: 16, 256>}, {pipeline_mode = #tpu.pipeline_mode<synchronous>, transform_indices = @transform_2, window_bounds = array<i64: 1, 256>}, {pipeline_mode = #tpu.pipeline_mode<synchronous>, transform_indices = @transform_3, window_bounds = array<i64: 256, 256>}, {pipeline_mode = #tpu.pipeline_mode<synchronous>, transform_indices = @transform_4, window_bounds = array<i64: 1, 256>}, {pipeline_mode = #tpu.pipeline_mode<synchronous>, transform_indices = @transform_5, window_bounds = array<i64: 256, 128>}, {pipeline_mode = #tpu.pipeline_mode<synchronous>, transform_indices = @transform_6, window_bounds = array<i64: 1, 128>}, {transform_indices = @transform_7, window_bounds = array<i64: 208, 128>}]} {
    %c0 = arith.constant 0 : index
    %c0_0 = arith.constant 0 : index
    %0 = vector.load %arg1[%c0, %c0_0] : memref<208x16xbf16, #tpu.memory_space<vmem>>, vector<208x16xbf16>
    %c0_1 = arith.constant 0 : index
    %c0_2 = arith.constant 0 : index
    %1 = vector.load %arg2[%c0_1, %c0_2] : memref<16x256xbf16, #tpu.memory_space<vmem>>, vector<16x256xbf16>
    %cst = arith.constant dense<0.000000e+00> : vector<208x256xf32>
    %2 = tpu.matmul %0, %1, %cst {dimension_numbers = #tpu.dot_dimension_numbers<[1], [0], [0], [1], [0, 0, 1, 1], [], []>} : vector<208x16xbf16>, vector<16x256xbf16>, vector<208x256xf32> -> vector<208x256xf32>
    %c0_3 = arith.constant 0 : index
    %c0_4 = arith.constant 0 : index
    %3 = vector.load %arg3[%c0_3, %c0_4] : memref<1x256xf32, #tpu.memory_space<vmem>>, vector<1x256xf32>
    %4 = vector.broadcast %3 : vector<1x256xf32> to vector<208x256xf32>
    %5 = arith.addf %2, %4 : vector<208x256xf32>
    %cst_5 = arith.constant 0.000000e+00 : f32
    %6 = vector.broadcast %cst_5 : f32 to vector<208x256xf32>
    %7 = arith.maximumf %5, %6 : vector<208x256xf32>
    %8 = arith.truncf %7 : vector<208x256xf32> to vector<208x256xbf16>
    %c0_6 = arith.constant 0 : index
    %c0_7 = arith.constant 0 : index
    %9 = vector.load %arg4[%c0_6, %c0_7] : memref<256x256xbf16, #tpu.memory_space<vmem>>, vector<256x256xbf16>
    %cst_8 = arith.constant dense<0.000000e+00> : vector<208x256xf32>
    %10 = tpu.matmul %8, %9, %cst_8 {dimension_numbers = #tpu.dot_dimension_numbers<[1], [0], [0], [1], [0, 0, 1, 1], [], []>} : vector<208x256xbf16>, vector<256x256xbf16>, vector<208x256xf32> -> vector<208x256xf32>
    %c0_9 = arith.constant 0 : index
    %c0_10 = arith.constant 0 : index
    %11 = vector.load %arg5[%c0_9, %c0_10] : memref<1x256xf32, #tpu.memory_space<vmem>>, vector<1x256xf32>
    %12 = vector.broadcast %11 : vector<1x256xf32> to vector<208x256xf32>
    %13 = arith.addf %10, %12 : vector<208x256xf32>
    %cst_11 = arith.constant 0.000000e+00 : f32
    %14 = vector.broadcast %cst_11 : f32 to vector<208x256xf32>
    %15 = arith.maximumf %13, %14 : vector<208x256xf32>
    %16 = arith.truncf %15 : vector<208x256xf32> to vector<208x256xbf16>
    %c0_12 = arith.constant 0 : index
    %c0_13 = arith.constant 0 : index
    %17 = vector.load %arg6[%c0_12, %c0_13] : memref<256x128xbf16, #tpu.memory_space<vmem>>, vector<256x128xbf16>
    %cst_14 = arith.constant dense<0.000000e+00> : vector<208x128xf32>
    %18 = tpu.matmul %16, %17, %cst_14 {dimension_numbers = #tpu.dot_dimension_numbers<[1], [0], [0], [1], [0, 0, 1, 1], [], []>} : vector<208x256xbf16>, vector<256x128xbf16>, vector<208x128xf32> -> vector<208x128xf32>
    %c0_15 = arith.constant 0 : index
    %c0_16 = arith.constant 0 : index
    %19 = vector.load %arg7[%c0_15, %c0_16] : memref<1x128xf32, #tpu.memory_space<vmem>>, vector<1x128xf32>
    %20 = vector.broadcast %19 : vector<1x128xf32> to vector<208x128xf32>
    %21 = arith.addf %18, %20 : vector<208x128xf32>
    %22 = arith.truncf %21 : vector<208x128xf32> to vector<208x128xbf16>
    %c0_17 = arith.constant 0 : index
    %c0_18 = arith.constant 0 : index
    %23 = vector.load %arg8[%c0_17, %c0_18] : memref<208x128xbf16, #tpu.memory_space<vmem>>, vector<208x128xbf16>
    tpu.vector_store %arg8[%c0_17, %c0_18], %22 {strides = array<i32>} : memref<208x128xbf16, #tpu.memory_space<vmem>>, vector<208x128xbf16>,
    return
  }
  func.func @transform_0(%arg0: i32) -> (i32, i32) {
    %c0_i32 = arith.constant 0 : i32
    %c0_i32_0 = arith.constant 0 : i32
    return %arg0, %c0_i32 : i32, i32
  }
  func.func @transform_1(%arg0: i32) -> (i32, i32) {
    %c0_i32 = arith.constant 0 : i32
    %c0_i32_0 = arith.constant 0 : i32
    %c0_i32_1 = arith.constant 0 : i32
    return %c0_i32, %c0_i32_0 : i32, i32
  }
  func.func @transform_2(%arg0: i32) -> (i32, i32) {
    %c0_i32 = arith.constant 0 : i32
    %c0_i32_0 = arith.constant 0 : i32
    %c0_i32_1 = arith.constant 0 : i32
    return %c0_i32, %c0_i32_0 : i32, i32
  }
  func.func @transform_3(%arg0: i32) -> (i32, i32) {
    %c0_i32 = arith.constant 0 : i32
    %c0_i32_0 = arith.constant 0 : i32
    %c0_i32_1 = arith.constant 0 : i32
    return %c0_i32, %c0_i32_0 : i32, i32
  }
  func.func @transform_4(%arg0: i32) -> (i32, i32) {
    %c0_i32 = arith.constant 0 : i32
    %c0_i32_0 = arith.constant 0 : i32
    %c0_i32_1 = arith.constant 0 : i32
    return %c0_i32, %c0_i32_0 : i32, i32
  }
  func.func @transform_5(%arg0: i32) -> (i32, i32) {
    %c0_i32 = arith.constant 0 : i32
    %c0_i32_0 = arith.constant 0 : i32
    %c0_i32_1 = arith.constant 0 : i32
    return %c0_i32, %c0_i32_0 : i32, i32
  }
  func.func @transform_6(%arg0: i32) -> (i32, i32) {
    %c0_i32 = arith.constant 0 : i32
    %c0_i32_0 = arith.constant 0 : i32
    %c0_i32_1 = arith.constant 0 : i32
    return %c0_i32, %c0_i32_0 : i32, i32
  }
  func.func @transform_7(%arg0: i32) -> (i32, i32) {
    %c0_i32 = arith.constant 0 : i32
    %c0_i32_0 = arith.constant 0 : i32
    return %arg0, %c0_i32 : i32, i32
  }
}

</mosaic_0001>

<llo_original>
// kernel: deep_q_network.1
$region0: #{deep_q_network.1}
  #allocation0 [shape = 'u32[]', space=smem, size = 0x4, offset = 0x4, fixed_abs, tag = 'smem constant byte address 0x4 - core index']
  #allocation1 [shape = 'u32[144,128]{1,0:T(1,128)}', space=vmem, size = 0x12000, scoped, tag = 'internal scratch']
  %s0 = inlined_call_operand.vmem [shape: bf16[208,16], index: 0, kind: input, shape index: {}]
  %s1 = inlined_call_operand.vmem [shape: bf16[16,256], index: 1, kind: input, shape index: {}]
  %s2 = inlined_call_operand.vmem [shape: f32[1,256], index: 2, kind: input, shape index: {}]
  %s3 = inlined_call_operand.vmem [shape: bf16[256,256], index: 3, kind: input, shape index: {}]
  %s4 = inlined_call_operand.vmem [shape: f32[1,256], index: 4, kind: input, shape index: {}]
  %s5 = inlined_call_operand.hbm [shape: bf16[256,128], index: 5, kind: input, shape index: {}]
  %s6 = inlined_call_operand.vmem [shape: f32[1,128], index: 6, kind: input, shape index: {}]
  %s7 = inlined_call_operand.vmem [shape: bf16[208,128], index: 7, kind: output, shape index: {}]
  %s8 = sld [smem:[#allocation0]]
  $region42: #{deep_q_network.1} parent=0
    _
  %s10 = ssub.s32 1, %s8
  %s11 = scalar_select 0, %s10, %s8
  $region1: #{deep_q_network.1} parent=0
    #allocation2 [shape = 'u8[65536]{0}', space=vmem, size = 0x10000, scoped, tag = 'input window, operand 5, single buffered']
    #allocation3 [shape = 's32[1]{0}', space=sflag, size = 0x4, scoped, tag = 'scoped memory for deep_q_network.1']
    %12 = vsyncpa [#allocation3], 0
    // Predicated region
    $region2: #{deep_q_network.1} parent=1 // pred_check
      _
    $region3: #{deep_q_network.1} parent=1 // pred_check_branch
      %14 = sbr.rel (0) target = $region5
    $region4: #{deep_q_network.1} parent=1 // pred_region
      _
    $region5: #{deep_q_network.1} parent=1 // pred_fallthru
      _
    // Predicated region
    $region6: #{deep_q_network.1} parent=1 // pred_check
      _
    $region7: #{deep_q_network.1} parent=1 // pred_check_branch
      %16 = sbr.rel (0) target = $region9
    $region8: #{deep_q_network.1} parent=1 // pred_region
      _
    $region9: #{deep_q_network.1} parent=1 // pred_fallthru
      _
    // Predicated region
    $region10: #{deep_q_network.1} parent=1 // pred_check
      _
    $region11: #{deep_q_network.1} parent=1 // pred_check_branch
      %18 = sbr.rel (0) target = $region13
    $region12: #{deep_q_network.1} parent=1 // pred_region
      _
    $region13: #{deep_q_network.1} parent=1 // pred_fallthru
      _
    // Predicated region
    $region14: #{deep_q_network.1} parent=1 // pred_check
      _
    $region15: #{deep_q_network.1} parent=1 // pred_check_branch
      %20 = sbr.rel (0) target = $region17
    $region16: #{deep_q_network.1} parent=1 // pred_region
      _
    $region17: #{deep_q_network.1} parent=1 // pred_fallthru
      _
    // Predicated region
    $region18: #{deep_q_network.1} parent=1 // pred_check
      _
    $region19: #{deep_q_network.1} parent=1 // pred_check_branch
      %22 = sbr.rel (0) target = $region21
    $region20: #{deep_q_network.1} parent=1 // pred_region
      _
    $region21: #{deep_q_network.1} parent=1 // pred_fallthru
      _
    // Predicated region
    $region22: #{deep_q_network.1} parent=1 // pred_check
      _
    $region23: #{deep_q_network.1} parent=1 // pred_check_branch
      %24 = sbr.rel (0) target = $region25
    $region24: #{deep_q_network.1} parent=1 // pred_region
      %s26 = ssub.s32 2048, 2048
      %27 = vsyncadd [#allocation3], %s26
      %s28 = sshll.u32 [#allocation2], 4
      %s29 = int_to_ptr.vmem [resolvable:$true] %s28
      %34 = dma.hbm_to_vmem [thread:$0]  %s5, 2048, %s29, [#allocation3], 64, 64, 4
    $region25: #{deep_q_network.1} parent=1 // pred_fallthru
      _
    // Predicated region
    $region26: #{deep_q_network.1} parent=1 // pred_check
      _
    $region27: #{deep_q_network.1} parent=1 // pred_check_branch
      %36 = sbr.rel (0) target = $region29
    $region28: #{deep_q_network.1} parent=1 // pred_region
      _
    $region29: #{deep_q_network.1} parent=1 // pred_fallthru
      _
    // Predicated region
    $region30: #{deep_q_network.1} parent=1 // pred_check
      _
    $region31: #{deep_q_network.1} parent=1 // pred_check_branch
      %38 = sbr.rel (0) target = $region33
    $region32: #{deep_q_network.1} parent=1 // pred_region
      %39 = dma.done [#allocation3], 2048
    $region33: #{deep_q_network.1} parent=1 // pred_fallthru
      _
    %v41 = vld [vmem:[%s0] sm:$0xf]
    %v42 = vld [vmem:[%s0 + $0x4] sm:$0xf]
    %v43 = vld [vmem:[%s0 + $0x8] sm:$0xf]
    %v44 = vld [vmem:[%s0 + $0xc] sm:$0xf]
    %v45 = vld [vmem:[%s0 + $0x10] sm:$0xf]
    %v46 = vld [vmem:[%s0 + $0x14] sm:$0xf]
    %v47 = vld [vmem:[%s0 + $0x18] sm:$0xf]
    %v48 = vld [vmem:[%s0 + $0x1c] sm:$0xf]
    %v49 = vld [vmem:[%s0 + $0x20] sm:$0xf]
    %v50 = vld [vmem:[%s0 + $0x24] sm:$0xf]
    %v51 = vld [vmem:[%s0 + $0x28] sm:$0xf]
    %v52 = vld [vmem:[%s0 + $0x2c] sm:$0xf]
    %v53 = vld [vmem:[%s0 + $0x30] sm:$0xf]
    %v54 = vld [vmem:[%s0 + $0x34] sm:$0xf]
    %v55 = vld [vmem:[%s0 + $0x38] sm:$0xf]
    %v56 = vld [vmem:[%s0 + $0x3c] sm:$0xf]
    %v57 = vld [vmem:[%s0 + $0x40] sm:$0xf]
    %v58 = vld [vmem:[%s0 + $0x44] sm:$0xf]
    %v59 = vld [vmem:[%s0 + $0x48] sm:$0xf]
    %v60 = vld [vmem:[%s0 + $0x4c] sm:$0xf]
    %v61 = vld [vmem:[%s0 + $0x50] sm:$0xf]
    %v62 = vld [vmem:[%s0 + $0x54] sm:$0xf]
    %v63 = vld [vmem:[%s0 + $0x58] sm:$0xf]
    %v64 = vld [vmem:[%s0 + $0x5c] sm:$0xf]
    %v65 = vld [vmem:[%s0 + $0x60] sm:$0xf]
    %v66 = vld [vmem:[%s0 + $0x64] sm:$0xf]
    %v67 = vld [vmem:[%s1] sm:$0xff]
    %v68 = vld [vmem:[%s1 + $0x8] sm:$0xff]
    %v69 = vld [vmem:[%s2] sm:$0x3]
    %v71 = vlaneseq
    %v72 = vshrl.u32 %v71, 7
    %v73 = vsub.s32 0, %v72
    %v74 = vrot.slane %v69, %v73
    %v75 = vlaneseq
    %v76 = vshrl.u32 %v75, 7
    %v77 = vsub.s32 1, %v76
    %v78 = vrot.slane %v69, %v77
    %v107 = vunpack.c.l.b16 %v41
    %v108 = vunpack.c.l.b16 %v42
    %v109 = vunpack.c.l.b16 %v43
    %v110 = vunpack.c.l.b16 %v44
    %v111 = vunpack.c.l.b16 %v45
    %v112 = vunpack.c.l.b16 %v46
    %v113 = vunpack.c.l.b16 %v47
    %v114 = vunpack.c.l.b16 %v48
    %v115 = vunpack.c.l.b16 %v49
    %v116 = vunpack.c.l.b16 %v50
    %v117 = vunpack.c.l.b16 %v51
    %v118 = vunpack.c.l.b16 %v52
    %v119 = vunpack.c.l.b16 %v53
    %v120 = vunpack.c.l.b16 %v54
    %v121 = vunpack.c.l.b16 %v55
    %v122 = vunpack.c.l.b16 %v56
    %v123 = vunpack.c.l.b16 %v57
    %v124 = vunpack.c.l.b16 %v58
    %v125 = vunpack.c.l.b16 %v59
    %v126 = vunpack.c.l.b16 %v60
    %v127 = vunpack.c.l.b16 %v61
    %v128 = vunpack.c.l.b16 %v62
    %v129 = vunpack.c.l.b16 %v63
    %v130 = vunpack.c.l.b16 %v64
    %v131 = vunpack.c.l.b16 %v65
    %v132 = vunpack.c.l.b16 %v66
    %v133 = vpack.c.b16 %v108, %v107
    %v134 = vpack.c.b16 %v110, %v109
    %v135 = vpack.c.b16 %v112, %v111
    %v136 = vpack.c.b16 %v114, %v113
    %v137 = vpack.c.b16 %v116, %v115
    %v138 = vpack.c.b16 %v118, %v117
    %v139 = vpack.c.b16 %v120, %v119
    %v140 = vpack.c.b16 %v122, %v121
    %v141 = vpack.c.b16 %v124, %v123
    %v142 = vpack.c.b16 %v126, %v125
    %v143 = vpack.c.b16 %v128, %v127
    %v144 = vpack.c.b16 %v130, %v129
    %v145 = vpack.c.b16 %v132, %v131
    %v148 = vunpack.c.l.b16 %v67
    %v149 = vunpack.c.h.b16 %v67
    %v150 = vunpack.c.l.b16 %v68
    %v151 = vunpack.c.h.b16 %v68
    %v152 = vpack.c.b16 %v150, %v148
    %v153 = vpack.c.b16 %v151, %v149
    %vm156 = vcmask 130048
    %v158 = vsel %vm156, %v133, 0
    %v161 = vsel %vm156, %v134, 0
    %v164 = vsel %vm156, %v135, 0
    %v167 = vsel %vm156, %v136, 0
    %v170 = vsel %vm156, %v137, 0
    %v173 = vsel %vm156, %v138, 0
    %v176 = vsel %vm156, %v139, 0
    %v179 = vsel %vm156, %v140, 0
    %v182 = vsel %vm156, %v141, 0
    %v185 = vsel %vm156, %v142, 0
    %v188 = vsel %vm156, %v143, 0
    %v191 = vsel %vm156, %v144, 0
    %v194 = vsel %vm156, %v145, 0
    %196 = vmatprep.subr.bf16.mxu0 0
    %197 = vmatpush1.bf16.msra.mxu0 0
    %198 = vmatprep.subr.bf16.mxu0 0
    %199 = vmatpush1.bf16.msra.mxu0 0
    %200 = vmatprep.subr.bf16.mxu0 0
    %201 = vmatpush1.bf16.msra.mxu0 0
    %202 = vmatprep.subr.bf16.mxu0 0
    %203 = vmatpush1.bf16.msra.mxu0 0
    %204 = vmatprep.subr.bf16.mxu0 0
    %205 = vmatpush1.bf16.msra.mxu0 0
    %206 = vmatprep.subr.bf16.mxu0 0
    %207 = vmatpush1.bf16.msra.mxu0 0
    %208 = vmatprep.subr.bf16.mxu0 0
    %209 = vmatpush1.bf16.msra.mxu0 0
    %210 = vmatprep.subr.bf16.mxu0 %v153
    %211 = vmatpush1.bf16.msra.mxu0 %v152
    %212 = vmatprep.subr.bf16.mxu0 0
    %213 = vmatpush2.bf16.msra.mxu0 0
    %214 = vmatprep.subr.bf16.mxu0 0
    %215 = vmatpush2.bf16.msra.mxu0 0
    %216 = vmatprep.subr.bf16.mxu0 0
    %217 = vmatpush2.bf16.msra.mxu0 0
    %218 = vmatprep.subr.bf16.mxu0 0
    %219 = vmatpush2.bf16.msra.mxu0 0
    %220 = vmatprep.subr.bf16.mxu0 0
    %221 = vmatpush2.bf16.msra.mxu0 0
    %222 = vmatprep.subr.bf16.mxu0 0
    %223 = vmatpush2.bf16.msra.mxu0 0
    %224 = vmatprep.subr.bf16.mxu0 0
    %225 = vmatpush2.bf16.msra.mxu0 0
    %226 = vmatprep.subr.bf16.mxu0 0
    %227 = vmatpush2.bf16.msra.mxu0 0
    %228 = vmatprep.mubr.bf16.mxu0 0
    %229 = vmatmul.mubr.bf16.gmra.mxu0 %v158
    %v230 = vpop.f32.mrf.mxu0
    %v231 = vadd.f32 %v74, %v230
    %v232 = vpop.f32.mrf.mxu0
    %v233 = vadd.f32 %v78, %v232
    %v234 = vpop.f32.mrf.mxu0
    %v235 = vadd.f32 %v74, %v234
    %v236 = vpop.f32.mrf.mxu0
    %v237 = vadd.f32 %v78, %v236
    %238 = vmatprep.mubr.bf16.mxu0 0
    %239 = vmatmul.mubr.bf16.gmra.mxu0 %v161
    %v240 = vpop.f32.mrf.mxu0
    %v241 = vadd.f32 %v74, %v240
    %v242 = vpop.f32.mrf.mxu0
    %v243 = vadd.f32 %v78, %v242
    %v244 = vpop.f32.mrf.mxu0
    %v245 = vadd.f32 %v74, %v244
    %v246 = vpop.f32.mrf.mxu0
    %v247 = vadd.f32 %v78, %v246
    %248 = vmatprep.mubr.bf16.mxu0 0
    %249 = vmatmul.mubr.bf16.gmra.mxu0 %v164
    %v250 = vpop.f32.mrf.mxu0
    %v251 = vadd.f32 %v74, %v250
    %v252 = vpop.f32.mrf.mxu0
    %v253 = vadd.f32 %v78, %v252
    %v254 = vpop.f32.mrf.mxu0
    %v255 = vadd.f32 %v74, %v254
    %v256 = vpop.f32.mrf.mxu0
    %v257 = vadd.f32 %v78, %v256
    %258 = vmatprep.mubr.bf16.mxu0 0
    %259 = vmatmul.mubr.bf16.gmra.mxu0 %v167
    %v260 = vpop.f32.mrf.mxu0
    %v261 = vadd.f32 %v74, %v260
    %v262 = vpop.f32.mrf.mxu0
    %v263 = vadd.f32 %v78, %v262
    %v264 = vpop.f32.mrf.mxu0
    %v265 = vadd.f32 %v74, %v264
    %v266 = vpop.f32.mrf.mxu0
    %v267 = vadd.f32 %v78, %v266
    %268 = vmatprep.mubr.bf16.mxu0 0
    %269 = vmatmul.mubr.bf16.gmra.mxu0 %v170
    %v270 = vpop.f32.mrf.mxu0
    %v271 = vadd.f32 %v74, %v270
    %v272 = vpop.f32.mrf.mxu0
    %v273 = vadd.f32 %v78, %v272
    %v274 = vpop.f32.mrf.mxu0
    %v275 = vadd.f32 %v74, %v274
    %v276 = vpop.f32.mrf.mxu0
    %v277 = vadd.f32 %v78, %v276
    %278 = vmatprep.mubr.bf16.mxu0 0
    %279 = vmatmul.mubr.bf16.gmra.mxu0 %v173
    %v280 = vpop.f32.mrf.mxu0
    %v281 = vadd.f32 %v74, %v280
    %v282 = vpop.f32.mrf.mxu0
    %v283 = vadd.f32 %v78, %v282
    %v284 = vpop.f32.mrf.mxu0
    %v285 = vadd.f32 %v74, %v284
    %v286 = vpop.f32.mrf.mxu0
    %v287 = vadd.f32 %v78, %v286
    %288 = vmatprep.mubr.bf16.mxu0 0
    %289 = vmatmul.mubr.bf16.gmra.mxu0 %v176
    %v290 = vpop.f32.mrf.mxu0
    %v291 = vadd.f32 %v74, %v290
    %v292 = vpop.f32.mrf.mxu0
    %v293 = vadd.f32 %v78, %v292
    %v294 = vpop.f32.mrf.mxu0
    %v295 = vadd.f32 %v74, %v294
    %v296 = vpop.f32.mrf.mxu0
    %v297 = vadd.f32 %v78, %v296
    %298 = vmatprep.mubr.bf16.mxu0 0
    %299 = vmatmul.mubr.bf16.gmra.mxu0 %v179
    %v300 = vpop.f32.mrf.mxu0
    %v301 = vadd.f32 %v74, %v300
    %v302 = vpop.f32.mrf.mxu0
    %v303 = vadd.f32 %v78, %v302
    %v304 = vpop.f32.mrf.mxu0
    %v305 = vadd.f32 %v74, %v304
    %v306 = vpop.f32.mrf.mxu0
    %v307 = vadd.f32 %v78, %v306
    %308 = vmatprep.mubr.bf16.mxu0 0
    %309 = vmatmul.mubr.bf16.gmra.mxu0 %v182
    %v310 = vpop.f32.mrf.mxu0
    %v311 = vadd.f32 %v74, %v310
    %v312 = vpop.f32.mrf.mxu0
    %v313 = vadd.f32 %v78, %v312
    %v314 = vpop.f32.mrf.mxu0
    %v315 = vadd.f32 %v74, %v314
    %v316 = vpop.f32.mrf.mxu0
    %v317 = vadd.f32 %v78, %v316
    %318 = vmatprep.mubr.bf16.mxu0 0
    %319 = vmatmul.mubr.bf16.gmra.mxu0 %v185
    %v320 = vpop.f32.mrf.mxu0
    %v321 = vadd.f32 %v74, %v320
    %v322 = vpop.f32.mrf.mxu0
    %v323 = vadd.f32 %v78, %v322
    %v324 = vpop.f32.mrf.mxu0
    %v325 = vadd.f32 %v74, %v324
    %v326 = vpop.f32.mrf.mxu0
    %v327 = vadd.f32 %v78, %v326
    %328 = vmatprep.mubr.bf16.mxu0 0
    %329 = vmatmul.mubr.bf16.gmra.mxu0 %v188
    %v330 = vpop.f32.mrf.mxu0
    %v331 = vadd.f32 %v74, %v330
    %v332 = vpop.f32.mrf.mxu0
    %v333 = vadd.f32 %v78, %v332
    %v334 = vpop.f32.mrf.mxu0
    %v335 = vadd.f32 %v74, %v334
    %v336 = vpop.f32.mrf.mxu0
    %v337 = vadd.f32 %v78, %v336
    %338 = vmatprep.mubr.bf16.mxu0 0
    %339 = vmatmul.mubr.bf16.gmra.mxu0 %v191
    %v340 = vpop.f32.mrf.mxu0
    %v341 = vadd.f32 %v74, %v340
    %v342 = vpop.f32.mrf.mxu0
    %v343 = vadd.f32 %v78, %v342
    %v344 = vpop.f32.mrf.mxu0
    %v345 = vadd.f32 %v74, %v344
    %v346 = vpop.f32.mrf.mxu0
    %v347 = vadd.f32 %v78, %v346
    %348 = vmatprep.mubr.bf16.mxu0 0
    %349 = vmatmul.mubr.bf16.gmra.mxu0 %v194
    %v350 = vpop.f32.mrf.mxu0
    %v351 = vadd.f32 %v74, %v350
    %v352 = vpop.f32.mrf.mxu0
    %v353 = vadd.f32 %v78, %v352
    %v354 = vpop.f32.mrf.mxu0
    %v355 = vadd.f32 %v74, %v354
    %v356 = vpop.f32.mrf.mxu0
    %v357 = vadd.f32 %v78, %v356
    %358 = vdwg.mxu0
    %v359 = vmax.f32 %v231, 0.0
    %v360 = vmax.f32 %v233, 0.0
    %v361 = vmax.f32 %v235, 0.0
    %v362 = vmax.f32 %v237, 0.0
    %v363 = vmax.f32 %v241, 0.0
    %v364 = vmax.f32 %v243, 0.0
    %v365 = vmax.f32 %v245, 0.0
    %v366 = vmax.f32 %v247, 0.0
    %v367 = vmax.f32 %v251, 0.0
    %v368 = vmax.f32 %v253, 0.0
    %v369 = vmax.f32 %v255, 0.0
    %v370 = vmax.f32 %v257, 0.0
    %v371 = vmax.f32 %v261, 0.0
    %v372 = vmax.f32 %v263, 0.0
    %v373 = vmax.f32 %v265, 0.0
    %v374 = vmax.f32 %v267, 0.0
    %v375 = vmax.f32 %v271, 0.0
    %v376 = vmax.f32 %v273, 0.0
    %v377 = vmax.f32 %v275, 0.0
    %v378 = vmax.f32 %v277, 0.0
    %v379 = vmax.f32 %v281, 0.0
    %v380 = vmax.f32 %v283, 0.0
    %v381 = vmax.f32 %v285, 0.0
    %v382 = vmax.f32 %v287, 0.0
    %v383 = vmax.f32 %v291, 0.0
    %v384 = vmax.f32 %v293, 0.0
    %v385 = vmax.f32 %v295, 0.0
    %v386 = vmax.f32 %v297, 0.0
    %v387 = vmax.f32 %v301, 0.0
    %v388 = vmax.f32 %v303, 0.0
    %v389 = vmax.f32 %v305, 0.0
    %v390 = vmax.f32 %v307, 0.0
    %v391 = vmax.f32 %v311, 0.0
    %v392 = vmax.f32 %v313, 0.0
    %v393 = vmax.f32 %v315, 0.0
    %v394 = vmax.f32 %v317, 0.0
    %v395 = vmax.f32 %v321, 0.0
    %v396 = vmax.f32 %v323, 0.0
    %v397 = vmax.f32 %v325, 0.0
    %v398 = vmax.f32 %v327, 0.0
    %v399 = vmax.f32 %v331, 0.0
    %v400 = vmax.f32 %v333, 0.0
    %v401 = vmax.f32 %v335, 0.0
    %v402 = vmax.f32 %v337, 0.0
    %v403 = vmax.f32 %v341, 0.0
    %v404 = vmax.f32 %v343, 0.0
    %v405 = vmax.f32 %v345, 0.0
    %v406 = vmax.f32 %v347, 0.0
    %v407 = vmax.f32 %v351, 0.0
    %v408 = vmax.f32 %v353, 0.0
    %v409 = vmax.f32 %v355, 0.0
    %v410 = vmax.f32 %v357, 0.0
    %v411 = vpack.c.bf16 %v361, %v359
    %v412 = vpack.c.bf16 %v362, %v360
    %v413 = vpack.c.bf16 %v365, %v363
    %v414 = vpack.c.bf16 %v366, %v364
    %v415 = vpack.c.bf16 %v369, %v367
    %v416 = vpack.c.bf16 %v370, %v368
    %v417 = vpack.c.bf16 %v373, %v371
    %v418 = vpack.c.bf16 %v374, %v372
    %v419 = vpack.c.bf16 %v377, %v375
    %v420 = vpack.c.bf16 %v378, %v376
    %v421 = vpack.c.bf16 %v381, %v379
    %v422 = vpack.c.bf16 %v382, %v380
    %v423 = vpack.c.bf16 %v385, %v383
    %v424 = vpack.c.bf16 %v386, %v384
    %v425 = vpack.c.bf16 %v389, %v387
    %v426 = vpack.c.bf16 %v390, %v388
    %v427 = vpack.c.bf16 %v393, %v391
    %v428 = vpack.c.bf16 %v394, %v392
    %v429 = vpack.c.bf16 %v397, %v395
    %v430 = vpack.c.bf16 %v398, %v396
    %v431 = vpack.c.bf16 %v401, %v399
    %v432 = vpack.c.bf16 %v402, %v400
    %v433 = vpack.c.bf16 %v405, %v403
    %v434 = vpack.c.bf16 %v406, %v404
    %v435 = vpack.c.bf16 %v409, %v407
    %v436 = vpack.c.bf16 %v410, %v408
    %v437 = vld [vmem:[%s3] sm:$0xff]
    %v438 = vld [vmem:[%s3 + $0x8] sm:$0xff]
    %v439 = vld [vmem:[%s3 + $0x10] sm:$0xff]
    %v440 = vld [vmem:[%s3 + $0x18] sm:$0xff]
    %v441 = vld [vmem:[%s3 + $0x20] sm:$0xff]
    %v442 = vld [vmem:[%s3 + $0x28] sm:$0xff]
    %v443 = vld [vmem:[%s3 + $0x30] sm:$0xff]
    %v444 = vld [vmem:[%s3 + $0x38] sm:$0xff]
    %v445 = vld [vmem:[%s3 + $0x40] sm:$0xff]
    %v446 = vld [vmem:[%s3 + $0x48] sm:$0xff]
    %v447 = vld [vmem:[%s3 + $0x50] sm:$0xff]
    %v448 = vld [vmem:[%s3 + $0x58] sm:$0xff]
    %v449 = vld [vmem:[%s3 + $0x60] sm:$0xff]
    %v450 = vld [vmem:[%s3 + $0x68] sm:$0xff]
    %v451 = vld [vmem:[%s3 + $0x70] sm:$0xff]
    %v452 = vld [vmem:[%s3 + $0x78] sm:$0xff]
    %v453 = vld [vmem:[%s3 + $0x80] sm:$0xff]
    %v454 = vld [vmem:[%s3 + $0x88] sm:$0xff]
    %v455 = vld [vmem:[%s3 + $0x90] sm:$0xff]
    %v456 = vld [vmem:[%s3 + $0x98] sm:$0xff]
    %v457 = vld [vmem:[%s3 + $0xa0] sm:$0xff]
    %v458 = vld [vmem:[%s3 + $0xa8] sm:$0xff]
    %v459 = vld [vmem:[%s3 + $0xb0] sm:$0xff]
    %v460 = vld [vmem:[%s3 + $0xb8] sm:$0xff]
    %v461 = vld [vmem:[%s3 + $0xc0] sm:$0xff]
    %v462 = vld [vmem:[%s3 + $0xc8] sm:$0xff]
    %v463 = vld [vmem:[%s3 + $0xd0] sm:$0xff]
    %v464 = vld [vmem:[%s3 + $0xd8] sm:$0xff]
    %v465 = vld [vmem:[%s3 + $0xe0] sm:$0xff]
    %v466 = vld [vmem:[%s3 + $0xe8] sm:$0xff]
    %v467 = vld [vmem:[%s3 + $0xf0] sm:$0xff]
    %v468 = vld [vmem:[%s3 + $0xf8] sm:$0xff]
    %v469 = vld [vmem:[%s4] sm:$0x3]
    %v471 = vlaneseq
    %v472 = vshrl.u32 %v471, 7
    %v473 = vsub.s32 0, %v472
    %v474 = vrot.slane %v469, %v473
    %v475 = vlaneseq
    %v476 = vshrl.u32 %v475, 7
    %v477 = vsub.s32 1, %v476
    %v478 = vrot.slane %v469, %v477
    %v513 = vunpack.c.l.b16 %v437
    %v514 = vunpack.c.h.b16 %v437
    %v515 = vunpack.c.l.b16 %v438
    %v516 = vunpack.c.h.b16 %v438
    %v517 = vunpack.c.l.b16 %v439
    %v518 = vunpack.c.h.b16 %v439
    %v519 = vunpack.c.l.b16 %v440
    %v520 = vunpack.c.h.b16 %v440
    %v521 = vunpack.c.l.b16 %v441
    %v522 = vunpack.c.h.b16 %v441
    %v523 = vunpack.c.l.b16 %v442
    %v524 = vunpack.c.h.b16 %v442
    %v525 = vunpack.c.l.b16 %v443
    %v526 = vunpack.c.h.b16 %v443
    %v527 = vunpack.c.l.b16 %v444
    %v528 = vunpack.c.h.b16 %v444
    %v529 = vunpack.c.l.b16 %v445
    %v530 = vunpack.c.h.b16 %v445
    %v531 = vunpack.c.l.b16 %v446
    %v532 = vunpack.c.h.b16 %v446
    %v533 = vunpack.c.l.b16 %v447
    %v534 = vunpack.c.h.b16 %v447
    %v535 = vunpack.c.l.b16 %v448
    %v536 = vunpack.c.h.b16 %v448
    %v537 = vunpack.c.l.b16 %v449
    %v538 = vunpack.c.h.b16 %v449
    %v539 = vunpack.c.l.b16 %v450
    %v540 = vunpack.c.h.b16 %v450
    %v541 = vunpack.c.l.b16 %v451
    %v542 = vunpack.c.h.b16 %v451
    %v543 = vunpack.c.l.b16 %v452
    %v544 = vunpack.c.h.b16 %v452
    %v545 = vunpack.c.l.b16 %v453
    %v546 = vunpack.c.h.b16 %v453
    %v547 = vunpack.c.l.b16 %v454
    %v548 = vunpack.c.h.b16 %v454
    %v549 = vunpack.c.l.b16 %v455
    %v550 = vunpack.c.h.b16 %v455
    %v551 = vunpack.c.l.b16 %v456
    %v552 = vunpack.c.h.b16 %v456
    %v553 = vunpack.c.l.b16 %v457
    %v554 = vunpack.c.h.b16 %v457
    %v555 = vunpack.c.l.b16 %v458
    %v556 = vunpack.c.h.b16 %v458
    %v557 = vunpack.c.l.b16 %v459
    %v558 = vunpack.c.h.b16 %v459
    %v559 = vunpack.c.l.b16 %v460
    %v560 = vunpack.c.h.b16 %v460
    %v561 = vunpack.c.l.b16 %v461
    %v562 = vunpack.c.h.b16 %v461
    %v563 = vunpack.c.l.b16 %v462
    %v564 = vunpack.c.h.b16 %v462
    %v565 = vunpack.c.l.b16 %v463
    %v566 = vunpack.c.h.b16 %v463
    %v567 = vunpack.c.l.b16 %v464
    %v568 = vunpack.c.h.b16 %v464
    %v569 = vunpack.c.l.b16 %v465
    %v570 = vunpack.c.h.b16 %v465
    %v571 = vunpack.c.l.b16 %v466
    %v572 = vunpack.c.h.b16 %v466
    %v573 = vunpack.c.l.b16 %v467
    %v574 = vunpack.c.h.b16 %v467
    %v575 = vunpack.c.l.b16 %v468
    %v576 = vunpack.c.h.b16 %v468
    %v577 = vpack.c.b16 %v515, %v513
    %v578 = vpack.c.b16 %v516, %v514
    %v579 = vpack.c.b16 %v519, %v517
    %v580 = vpack.c.b16 %v520, %v518
    %v581 = vpack.c.b16 %v523, %v521
    %v582 = vpack.c.b16 %v524, %v522
    %v583 = vpack.c.b16 %v527, %v525
    %v584 = vpack.c.b16 %v528, %v526
    %v585 = vpack.c.b16 %v531, %v529
    %v586 = vpack.c.b16 %v532, %v530
    %v587 = vpack.c.b16 %v535, %v533
    %v588 = vpack.c.b16 %v536, %v534
    %v589 = vpack.c.b16 %v539, %v537
    %v590 = vpack.c.b16 %v540, %v538
    %v591 = vpack.c.b16 %v543, %v541
    %v592 = vpack.c.b16 %v544, %v542
    %v593 = vpack.c.b16 %v547, %v545
    %v594 = vpack.c.b16 %v548, %v546
    %v595 = vpack.c.b16 %v551, %v549
    %v596 = vpack.c.b16 %v552, %v550
    %v597 = vpack.c.b16 %v555, %v553
    %v598 = vpack.c.b16 %v556, %v554
    %v599 = vpack.c.b16 %v559, %v557
    %v600 = vpack.c.b16 %v560, %v558
    %v601 = vpack.c.b16 %v563, %v561
    %v602 = vpack.c.b16 %v564, %v562
    %v603 = vpack.c.b16 %v567, %v565
    %v604 = vpack.c.b16 %v568, %v566
    %v605 = vpack.c.b16 %v571, %v569
    %v606 = vpack.c.b16 %v572, %v570
    %v607 = vpack.c.b16 %v575, %v573
    %v608 = vpack.c.b16 %v576, %v574
    %641 = vmatprep.subr.bf16.mxu0 %v592
    %642 = vmatpush1.bf16.msra.mxu0 %v591
    %643 = vmatprep.subr.bf16.mxu0 %v590
    %644 = vmatpush1.bf16.msra.mxu0 %v589
    %645 = vmatprep.subr.bf16.mxu0 %v588
    %646 = vmatpush1.bf16.msra.mxu0 %v587
    %647 = vmatprep.subr.bf16.mxu0 %v586
    %648 = vmatpush1.bf16.msra.mxu0 %v585
    %649 = vmatprep.subr.bf16.mxu0 %v584
    %650 = vmatpush1.bf16.msra.mxu0 %v583
    %651 = vmatprep.subr.bf16.mxu0 %v582
    %652 = vmatpush1.bf16.msra.mxu0 %v581
    %653 = vmatprep.subr.bf16.mxu0 %v580
    %654 = vmatpush1.bf16.msra.mxu0 %v579
    %655 = vmatprep.subr.bf16.mxu0 %v578
    %656 = vmatpush1.bf16.msra.mxu0 %v577
    %657 = vmatprep.subr.bf16.mxu0 %v608
    %658 = vmatpush2.bf16.msra.mxu0 %v607
    %659 = vmatprep.subr.bf16.mxu0 %v606
    %660 = vmatpush2.bf16.msra.mxu0 %v605
    %661 = vmatprep.subr.bf16.mxu0 %v604
    %662 = vmatpush2.bf16.msra.mxu0 %v603
    %663 = vmatprep.subr.bf16.mxu0 %v602
    %664 = vmatpush2.bf16.msra.mxu0 %v601
    %665 = vmatprep.subr.bf16.mxu0 %v600
    %666 = vmatpush2.bf16.msra.mxu0 %v599
    %667 = vmatprep.subr.bf16.mxu0 %v598
    %668 = vmatpush2.bf16.msra.mxu0 %v597
    %669 = vmatprep.subr.bf16.mxu0 %v596
    %670 = vmatpush2.bf16.msra.mxu0 %v595
    %671 = vmatprep.subr.bf16.mxu0 %v594
    %672 = vmatpush2.bf16.msra.mxu0 %v593
    %673 = vmatprep.mubr.bf16.mxu0 %v412
    %674 = vmatmul.mubr.bf16.gmra.mxu0 %v411
    %v675 = vpop.f32.mrf.mxu0
    %v676 = vadd.f32 %v474, %v675
    %v677 = vpop.f32.mrf.mxu0
    %v678 = vadd.f32 %v478, %v677
    %v679 = vpop.f32.mrf.mxu0
    %v680 = vadd.f32 %v474, %v679
    %v681 = vpop.f32.mrf.mxu0
    %v682 = vadd.f32 %v478, %v681
    %683 = vmatprep.mubr.bf16.mxu0 %v414
    %684 = vmatmul.mubr.bf16.gmra.mxu0 %v413
    %v685 = vpop.f32.mrf.mxu0
    %v686 = vadd.f32 %v474, %v685
    %v687 = vpop.f32.mrf.mxu0
    %v688 = vadd.f32 %v478, %v687
    %v689 = vpop.f32.mrf.mxu0
    %v690 = vadd.f32 %v474, %v689
    %v691 = vpop.f32.mrf.mxu0
    %v692 = vadd.f32 %v478, %v691
    %693 = vmatprep.mubr.bf16.mxu0 %v416
    %694 = vmatmul.mubr.bf16.gmra.mxu0 %v415
    %v695 = vpop.f32.mrf.mxu0
    %v696 = vadd.f32 %v474, %v695
    %v697 = vpop.f32.mrf.mxu0
    %v698 = vadd.f32 %v478, %v697
    %v699 = vpop.f32.mrf.mxu0
    %v700 = vadd.f32 %v474, %v699
    %v701 = vpop.f32.mrf.mxu0
    %v702 = vadd.f32 %v478, %v701
    %703 = vmatprep.mubr.bf16.mxu0 %v418
    %704 = vmatmul.mubr.bf16.gmra.mxu0 %v417
    %v705 = vpop.f32.mrf.mxu0
    %v706 = vadd.f32 %v474, %v705
    %v707 = vpop.f32.mrf.mxu0
    %v708 = vadd.f32 %v478, %v707
    %v709 = vpop.f32.mrf.mxu0
    %v710 = vadd.f32 %v474, %v709
    %v711 = vpop.f32.mrf.mxu0
    %v712 = vadd.f32 %v478, %v711
    %713 = vmatprep.mubr.bf16.mxu0 %v420
    %714 = vmatmul.mubr.bf16.gmra.mxu0 %v419
    %v715 = vpop.f32.mrf.mxu0
    %v716 = vadd.f32 %v474, %v715
    %v717 = vpop.f32.mrf.mxu0
    %v718 = vadd.f32 %v478, %v717
    %v719 = vpop.f32.mrf.mxu0
    %v720 = vadd.f32 %v474, %v719
    %v721 = vpop.f32.mrf.mxu0
    %v722 = vadd.f32 %v478, %v721
    %723 = vmatprep.mubr.bf16.mxu0 %v422
    %724 = vmatmul.mubr.bf16.gmra.mxu0 %v421
    %v725 = vpop.f32.mrf.mxu0
    %v726 = vadd.f32 %v474, %v725
    %v727 = vpop.f32.mrf.mxu0
    %v728 = vadd.f32 %v478, %v727
    %v729 = vpop.f32.mrf.mxu0
    %v730 = vadd.f32 %v474, %v729
    %v731 = vpop.f32.mrf.mxu0
    %v732 = vadd.f32 %v478, %v731
    %733 = vmatprep.mubr.bf16.mxu0 %v424
    %734 = vmatmul.mubr.bf16.gmra.mxu0 %v423
    %v735 = vpop.f32.mrf.mxu0
    %v736 = vadd.f32 %v474, %v735
    %v737 = vpop.f32.mrf.mxu0
    %v738 = vadd.f32 %v478, %v737
    %v739 = vpop.f32.mrf.mxu0
    %v740 = vadd.f32 %v474, %v739
    %v741 = vpop.f32.mrf.mxu0
    %v742 = vadd.f32 %v478, %v741
    %743 = vmatprep.mubr.bf16.mxu0 %v426
    %744 = vmatmul.mubr.bf16.gmra.mxu0 %v425
    %v745 = vpop.f32.mrf.mxu0
    %v746 = vadd.f32 %v474, %v745
    %v747 = vpop.f32.mrf.mxu0
    %v748 = vadd.f32 %v478, %v747
    %v749 = vpop.f32.mrf.mxu0
    %v750 = vadd.f32 %v474, %v749
    %v751 = vpop.f32.mrf.mxu0
    %v752 = vadd.f32 %v478, %v751
    %753 = vmatprep.mubr.bf16.mxu0 %v428
    %754 = vmatmul.mubr.bf16.gmra.mxu0 %v427
    %v755 = vpop.f32.mrf.mxu0
    %v756 = vadd.f32 %v474, %v755
    %v757 = vpop.f32.mrf.mxu0
    %v758 = vadd.f32 %v478, %v757
    %v759 = vpop.f32.mrf.mxu0
    %v760 = vadd.f32 %v474, %v759
    %v761 = vpop.f32.mrf.mxu0
    %v762 = vadd.f32 %v478, %v761
    %763 = vmatprep.mubr.bf16.mxu0 %v430
    %764 = vmatmul.mubr.bf16.gmra.mxu0 %v429
    %v765 = vpop.f32.mrf.mxu0
    %v766 = vadd.f32 %v474, %v765
    %v767 = vpop.f32.mrf.mxu0
    %v768 = vadd.f32 %v478, %v767
    %v769 = vpop.f32.mrf.mxu0
    %v770 = vadd.f32 %v474, %v769
    %v771 = vpop.f32.mrf.mxu0
    %v772 = vadd.f32 %v478, %v771
    %773 = vmatprep.mubr.bf16.mxu0 %v432
    %774 = vmatmul.mubr.bf16.gmra.mxu0 %v431
    %v775 = vpop.f32.mrf.mxu0
    %v776 = vadd.f32 %v474, %v775
    %v777 = vpop.f32.mrf.mxu0
    %v778 = vadd.f32 %v478, %v777
    %v779 = vpop.f32.mrf.mxu0
    %v780 = vadd.f32 %v474, %v779
    %v781 = vpop.f32.mrf.mxu0
    %v782 = vadd.f32 %v478, %v781
    %783 = vmatprep.mubr.bf16.mxu0 %v434
    %784 = vmatmul.mubr.bf16.gmra.mxu0 %v433
    %v785 = vpop.f32.mrf.mxu0
    %v786 = vadd.f32 %v474, %v785
    %v787 = vpop.f32.mrf.mxu0
    %v788 = vadd.f32 %v478, %v787
    %v789 = vpop.f32.mrf.mxu0
    %v790 = vadd.f32 %v474, %v789
    %v791 = vpop.f32.mrf.mxu0
    %v792 = vadd.f32 %v478, %v791
    %793 = vmatprep.mubr.bf16.mxu0 %v436
    %794 = vmatmul.mubr.bf16.gmra.mxu0 %v435
    %v795 = vpop.f32.mrf.mxu0
    %v796 = vadd.f32 %v474, %v795
    %v797 = vpop.f32.mrf.mxu0
    %v798 = vadd.f32 %v478, %v797
    %v799 = vpop.f32.mrf.mxu0
    %v800 = vadd.f32 %v474, %v799
    %v801 = vpop.f32.mrf.mxu0
    %v802 = vadd.f32 %v478, %v801
    %803 = vdwg.mxu0
    %v804 = vmax.f32 %v676, 0.0
    %v805 = vmax.f32 %v678, 0.0
    %v806 = vmax.f32 %v680, 0.0
    %v807 = vmax.f32 %v682, 0.0
    %v808 = vmax.f32 %v686, 0.0
    %v809 = vmax.f32 %v688, 0.0
    %v810 = vmax.f32 %v690, 0.0
    %v811 = vmax.f32 %v692, 0.0
    %v812 = vmax.f32 %v696, 0.0
    %v813 = vmax.f32 %v698, 0.0
    %v814 = vmax.f32 %v700, 0.0
    %v815 = vmax.f32 %v702, 0.0
    %v816 = vmax.f32 %v706, 0.0
    %v817 = vmax.f32 %v708, 0.0
    %v818 = vmax.f32 %v710, 0.0
    %v819 = vmax.f32 %v712, 0.0
    %v820 = vmax.f32 %v716, 0.0
    %v821 = vmax.f32 %v718, 0.0
    %v822 = vmax.f32 %v720, 0.0
    %v823 = vmax.f32 %v722, 0.0
    %v824 = vmax.f32 %v726, 0.0
    %v825 = vmax.f32 %v728, 0.0
    %v826 = vmax.f32 %v730, 0.0
    %v827 = vmax.f32 %v732, 0.0
    %v828 = vmax.f32 %v736, 0.0
    %v829 = vmax.f32 %v738, 0.0
    %v830 = vmax.f32 %v740, 0.0
    %v831 = vmax.f32 %v742, 0.0
    %v832 = vmax.f32 %v746, 0.0
    %v833 = vmax.f32 %v748, 0.0
    %v834 = vmax.f32 %v750, 0.0
    %v835 = vmax.f32 %v752, 0.0
    %v836 = vmax.f32 %v756, 0.0
    %v837 = vmax.f32 %v758, 0.0
    %v838 = vmax.f32 %v760, 0.0
    %v839 = vmax.f32 %v762, 0.0
    %v840 = vmax.f32 %v766, 0.0
    %v841 = vmax.f32 %v768, 0.0
    %v842 = vmax.f32 %v770, 0.0
    %v843 = vmax.f32 %v772, 0.0
    %v844 = vmax.f32 %v776, 0.0
    %v845 = vmax.f32 %v778, 0.0
    %v846 = vmax.f32 %v780, 0.0
    %v847 = vmax.f32 %v782, 0.0
    %v848 = vmax.f32 %v786, 0.0
    %v849 = vmax.f32 %v788, 0.0
    %v850 = vmax.f32 %v790, 0.0
    %v851 = vmax.f32 %v792, 0.0
    %v852 = vmax.f32 %v796, 0.0
    %v853 = vmax.f32 %v798, 0.0
    %v854 = vmax.f32 %v800, 0.0
    %v855 = vmax.f32 %v802, 0.0
    %v856 = vpack.c.bf16 %v806, %v804
    %v857 = vpack.c.bf16 %v807, %v805
    %v858 = vpack.c.bf16 %v810, %v808
    %v859 = vpack.c.bf16 %v811, %v809
    %v860 = vpack.c.bf16 %v814, %v812
    %v861 = vpack.c.bf16 %v815, %v813
    %v862 = vpack.c.bf16 %v818, %v816
    %v863 = vpack.c.bf16 %v819, %v817
    %v864 = vpack.c.bf16 %v822, %v820
    %v865 = vpack.c.bf16 %v823, %v821
    %v866 = vpack.c.bf16 %v826, %v824
    %v867 = vpack.c.bf16 %v827, %v825
    %v868 = vpack.c.bf16 %v830, %v828
    %v869 = vpack.c.bf16 %v831, %v829
    %v870 = vpack.c.bf16 %v834, %v832
    %v871 = vpack.c.bf16 %v835, %v833
    %v872 = vpack.c.bf16 %v838, %v836
    %v873 = vpack.c.bf16 %v839, %v837
    %v874 = vpack.c.bf16 %v842, %v840
    %v875 = vpack.c.bf16 %v843, %v841
    %v876 = vpack.c.bf16 %v846, %v844
    %v877 = vpack.c.bf16 %v847, %v845
    %v878 = vpack.c.bf16 %v850, %v848
    %v879 = vpack.c.bf16 %v851, %v849
    %v880 = vpack.c.bf16 %v854, %v852
    %v881 = vpack.c.bf16 %v855, %v853
    %v882 = vld [vmem:[#allocation2] sm:$0xf]
    %v883 = vld [vmem:[#allocation2 + $0x4] sm:$0xf]
    %v884 = vld [vmem:[#allocation2 + $0x8] sm:$0xf]
    %v885 = vld [vmem:[#allocation2 + $0xc] sm:$0xf]
    %v886 = vld [vmem:[#allocation2 + $0x10] sm:$0xf]
    %v887 = vld [vmem:[#allocation2 + $0x14] sm:$0xf]
    %v888 = vld [vmem:[#allocation2 + $0x18] sm:$0xf]
    %v889 = vld [vmem:[#allocation2 + $0x1c] sm:$0xf]
    %v890 = vld [vmem:[#allocation2 + $0x20] sm:$0xf]
    %v891 = vld [vmem:[#allocation2 + $0x24] sm:$0xf]
    %v892 = vld [vmem:[#allocation2 + $0x28] sm:$0xf]
    %v893 = vld [vmem:[#allocation2 + $0x2c] sm:$0xf]
    %v894 = vld [vmem:[#allocation2 + $0x30] sm:$0xf]
    %v895 = vld [vmem:[#allocation2 + $0x34] sm:$0xf]
    %v896 = vld [vmem:[#allocation2 + $0x38] sm:$0xf]
    %v897 = vld [vmem:[#allocation2 + $0x3c] sm:$0xf]
    %v898 = vld [vmem:[#allocation2 + $0x40] sm:$0xf]
    %v899 = vld [vmem:[#allocation2 + $0x44] sm:$0xf]
    %v900 = vld [vmem:[#allocation2 + $0x48] sm:$0xf]
    %v901 = vld [vmem:[#allocation2 + $0x4c] sm:$0xf]
    %v902 = vld [vmem:[#allocation2 + $0x50] sm:$0xf]
    %v903 = vld [vmem:[#allocation2 + $0x54] sm:$0xf]
    %v904 = vld [vmem:[#allocation2 + $0x58] sm:$0xf]
    %v905 = vld [vmem:[#allocation2 + $0x5c] sm:$0xf]
    %v906 = vld [vmem:[#allocation2 + $0x60] sm:$0xf]
    %v907 = vld [vmem:[#allocation2 + $0x64] sm:$0xf]
    %v908 = vld [vmem:[#allocation2 + $0x68] sm:$0xf]
    %v909 = vld [vmem:[#allocation2 + $0x6c] sm:$0xf]
    %v910 = vld [vmem:[#allocation2 + $0x70] sm:$0xf]
    %v911 = vld [vmem:[#allocation2 + $0x74] sm:$0xf]
    %v912 = vld [vmem:[#allocation2 + $0x78] sm:$0xf]
    %v913 = vld [vmem:[#allocation2 + $0x7c] sm:$0xf]
    %v914 = vld [vmem:[%s6] sm:$0x1]
    %v916 = vlaneseq
    %v917 = vshrl.u32 %v916, 7
    %v918 = vsub.s32 0, %v917
    %v919 = vrot.slane %v914, %v918
    %v953 = vunpack.c.l.b16 %v882
    %v954 = vunpack.c.l.b16 %v883
    %v955 = vunpack.c.l.b16 %v884
    %v956 = vunpack.c.l.b16 %v885
    %v957 = vunpack.c.l.b16 %v886
    %v958 = vunpack.c.l.b16 %v887
    %v959 = vunpack.c.l.b16 %v888
    %v960 = vunpack.c.l.b16 %v889
    %v961 = vunpack.c.l.b16 %v890
    %v962 = vunpack.c.l.b16 %v891
    %v963 = vunpack.c.l.b16 %v892
    %v964 = vunpack.c.l.b16 %v893
    %v965 = vunpack.c.l.b16 %v894
    %v966 = vunpack.c.l.b16 %v895
    %v967 = vunpack.c.l.b16 %v896
    %v968 = vunpack.c.l.b16 %v897
    %v969 = vunpack.c.l.b16 %v898
    %v970 = vunpack.c.l.b16 %v899
    %v971 = vunpack.c.l.b16 %v900
    %v972 = vunpack.c.l.b16 %v901
    %v973 = vunpack.c.l.b16 %v902
    %v974 = vunpack.c.l.b16 %v903
    %v975 = vunpack.c.l.b16 %v904
    %v976 = vunpack.c.l.b16 %v905
    %v977 = vunpack.c.l.b16 %v906
    %v978 = vunpack.c.l.b16 %v907
    %v979 = vunpack.c.l.b16 %v908
    %v980 = vunpack.c.l.b16 %v909
    %v981 = vunpack.c.l.b16 %v910
    %v982 = vunpack.c.l.b16 %v911
    %v983 = vunpack.c.l.b16 %v912
    %v984 = vunpack.c.l.b16 %v913
    %v985 = vpack.c.b16 %v954, %v953
    %v986 = vpack.c.b16 %v956, %v955
    %v987 = vpack.c.b16 %v958, %v957
    %v988 = vpack.c.b16 %v960, %v959
    %v989 = vpack.c.b16 %v962, %v961
    %v990 = vpack.c.b16 %v964, %v963
    %v991 = vpack.c.b16 %v966, %v965
    %v992 = vpack.c.b16 %v968, %v967
    %v993 = vpack.c.b16 %v970, %v969
    %v994 = vpack.c.b16 %v972, %v971
    %v995 = vpack.c.b16 %v974, %v973
    %v996 = vpack.c.b16 %v976, %v975
    %v997 = vpack.c.b16 %v978, %v977
    %v998 = vpack.c.b16 %v980, %v979
    %v999 = vpack.c.b16 %v982, %v981
    %v1000 = vpack.c.b16 %v984, %v983
    %1017 = vmatprep.subr.bf16.mxu0 0
    %1018 = vmatpush1.bf16.msra.mxu0 %v992
    %1019 = vmatprep.subr.bf16.mxu0 0
    %1020 = vmatpush1.bf16.msra.mxu0 %v991
    %1021 = vmatprep.subr.bf16.mxu0 0
    %1022 = vmatpush1.bf16.msra.mxu0 %v990
    %1023 = vmatprep.subr.bf16.mxu0 0
    %1024 = vmatpush1.bf16.msra.mxu0 %v989
    %1025 = vmatprep.subr.bf16.mxu0 0
    %1026 = vmatpush1.bf16.msra.mxu0 %v988
    %1027 = vmatprep.subr.bf16.mxu0 0
    %1028 = vmatpush1.bf16.msra.mxu0 %v987
    %1029 = vmatprep.subr.bf16.mxu0 0
    %1030 = vmatpush1.bf16.msra.mxu0 %v986
    %1031 = vmatprep.subr.bf16.mxu0 0
    %1032 = vmatpush1.bf16.msra.mxu0 %v985
    %1033 = vmatprep.subr.bf16.mxu0 0
    %1034 = vmatpush2.bf16.msra.mxu0 %v1000
    %1035 = vmatprep.subr.bf16.mxu0 0
    %1036 = vmatpush2.bf16.msra.mxu0 %v999
    %1037 = vmatprep.subr.bf16.mxu0 0
    %1038 = vmatpush2.bf16.msra.mxu0 %v998
    %1039 = vmatprep.subr.bf16.mxu0 0
    %1040 = vmatpush2.bf16.msra.mxu0 %v997
    %1041 = vmatprep.subr.bf16.mxu0 0
    %1042 = vmatpush2.bf16.msra.mxu0 %v996
    %1043 = vmatprep.subr.bf16.mxu0 0
    %1044 = vmatpush2.bf16.msra.mxu0 %v995
    %1045 = vmatprep.subr.bf16.mxu0 0
    %1046 = vmatpush2.bf16.msra.mxu0 %v994
    %1047 = vmatprep.subr.bf16.mxu0 0
    %1048 = vmatpush2.bf16.msra.mxu0 %v993
    %1049 = vmatprep.mubr.bf16.mxu0 %v857
    %1050 = vmatmul.mubr.bf16.gmra.mxu0 %v856
    %v1051 = vpop.f32.mrf.mxu0
    %v1052 = vadd.f32 %v919, %v1051
    %v1053 = vpop.f32.mrf.mxu0
    %v1054 = vpop.f32.mrf.mxu0
    %v1055 = vadd.f32 %v919, %v1054
    %v1056 = vpop.f32.mrf.mxu0
    %1057 = vmatprep.mubr.bf16.mxu0 %v859
    %1058 = vmatmul.mubr.bf16.gmra.mxu0 %v858
    %v1059 = vpop.f32.mrf.mxu0
    %v1060 = vadd.f32 %v919, %v1059
    %v1061 = vpop.f32.mrf.mxu0
    %v1062 = vpop.f32.mrf.mxu0
    %v1063 = vadd.f32 %v919, %v1062
    %v1064 = vpop.f32.mrf.mxu0
    %1065 = vmatprep.mubr.bf16.mxu0 %v861
    %1066 = vmatmul.mubr.bf16.gmra.mxu0 %v860
    %v1067 = vpop.f32.mrf.mxu0
    %v1068 = vadd.f32 %v919, %v1067
    %v1069 = vpop.f32.mrf.mxu0
    %v1070 = vpop.f32.mrf.mxu0
    %v1071 = vadd.f32 %v919, %v1070
    %v1072 = vpop.f32.mrf.mxu0
    %1073 = vmatprep.mubr.bf16.mxu0 %v863
    %1074 = vmatmul.mubr.bf16.gmra.mxu0 %v862
    %v1075 = vpop.f32.mrf.mxu0
    %v1076 = vadd.f32 %v919, %v1075
    %v1077 = vpop.f32.mrf.mxu0
    %v1078 = vpop.f32.mrf.mxu0
    %v1079 = vadd.f32 %v919, %v1078
    %v1080 = vpop.f32.mrf.mxu0
    %1081 = vmatprep.mubr.bf16.mxu0 %v865
    %1082 = vmatmul.mubr.bf16.gmra.mxu0 %v864
    %v1083 = vpop.f32.mrf.mxu0
    %v1084 = vadd.f32 %v919, %v1083
    %v1085 = vpop.f32.mrf.mxu0
    %v1086 = vpop.f32.mrf.mxu0
    %v1087 = vadd.f32 %v919, %v1086
    %v1088 = vpop.f32.mrf.mxu0
    %1089 = vmatprep.mubr.bf16.mxu0 %v867
    %1090 = vmatmul.mubr.bf16.gmra.mxu0 %v866
    %v1091 = vpop.f32.mrf.mxu0
    %v1092 = vadd.f32 %v919, %v1091
    %v1093 = vpop.f32.mrf.mxu0
    %v1094 = vpop.f32.mrf.mxu0
    %v1095 = vadd.f32 %v919, %v1094
    %v1096 = vpop.f32.mrf.mxu0
    %1097 = vmatprep.mubr.bf16.mxu0 %v869
    %1098 = vmatmul.mubr.bf16.gmra.mxu0 %v868
    %v1099 = vpop.f32.mrf.mxu0
    %v1100 = vadd.f32 %v919, %v1099
    %v1101 = vpop.f32.mrf.mxu0
    %v1102 = vpop.f32.mrf.mxu0
    %v1103 = vadd.f32 %v919, %v1102
    %v1104 = vpop.f32.mrf.mxu0
    %1105 = vmatprep.mubr.bf16.mxu0 %v871
    %1106 = vmatmul.mubr.bf16.gmra.mxu0 %v870
    %v1107 = vpop.f32.mrf.mxu0
    %v1108 = vadd.f32 %v919, %v1107
    %v1109 = vpop.f32.mrf.mxu0
    %v1110 = vpop.f32.mrf.mxu0
    %v1111 = vadd.f32 %v919, %v1110
    %v1112 = vpop.f32.mrf.mxu0
    %1113 = vmatprep.mubr.bf16.mxu0 %v873
    %1114 = vmatmul.mubr.bf16.gmra.mxu0 %v872
    %v1115 = vpop.f32.mrf.mxu0
    %v1116 = vadd.f32 %v919, %v1115
    %v1117 = vpop.f32.mrf.mxu0
    %v1118 = vpop.f32.mrf.mxu0
    %v1119 = vadd.f32 %v919, %v1118
    %v1120 = vpop.f32.mrf.mxu0
    %1121 = vmatprep.mubr.bf16.mxu0 %v875
    %1122 = vmatmul.mubr.bf16.gmra.mxu0 %v874
    %v1123 = vpop.f32.mrf.mxu0
    %v1124 = vadd.f32 %v919, %v1123
    %v1125 = vpop.f32.mrf.mxu0
    %v1126 = vpop.f32.mrf.mxu0
    %v1127 = vadd.f32 %v919, %v1126
    %v1128 = vpop.f32.mrf.mxu0
    %1129 = vmatprep.mubr.bf16.mxu0 %v877
    %1130 = vmatmul.mubr.bf16.gmra.mxu0 %v876
    %v1131 = vpop.f32.mrf.mxu0
    %v1132 = vadd.f32 %v919, %v1131
    %v1133 = vpop.f32.mrf.mxu0
    %v1134 = vpop.f32.mrf.mxu0
    %v1135 = vadd.f32 %v919, %v1134
    %v1136 = vpop.f32.mrf.mxu0
    %1137 = vmatprep.mubr.bf16.mxu0 %v879
    %1138 = vmatmul.mubr.bf16.gmra.mxu0 %v878
    %v1139 = vpop.f32.mrf.mxu0
    %v1140 = vadd.f32 %v919, %v1139
    %v1141 = vpop.f32.mrf.mxu0
    %v1142 = vpop.f32.mrf.mxu0
    %v1143 = vadd.f32 %v919, %v1142
    %v1144 = vpop.f32.mrf.mxu0
    %1145 = vmatprep.mubr.bf16.mxu0 %v881
    %1146 = vmatmul.mubr.bf16.gmra.mxu0 %v880
    %v1147 = vpop.f32.mrf.mxu0
    %v1148 = vadd.f32 %v919, %v1147
    %v1149 = vpop.f32.mrf.mxu0
    %v1150 = vpop.f32.mrf.mxu0
    %v1151 = vadd.f32 %v919, %v1150
    %v1152 = vpop.f32.mrf.mxu0
    %1153 = vdwg.mxu0
    %v1154 = vpack.c.bf16 %v1055, %v1052
    %v1155 = vpack.c.bf16 %v1063, %v1060
    %v1156 = vpack.c.bf16 %v1071, %v1068
    %v1157 = vpack.c.bf16 %v1079, %v1076
    %v1158 = vpack.c.bf16 %v1087, %v1084
    %v1159 = vpack.c.bf16 %v1095, %v1092
    %v1160 = vpack.c.bf16 %v1103, %v1100
    %v1161 = vpack.c.bf16 %v1111, %v1108
    %v1162 = vpack.c.bf16 %v1119, %v1116
    %v1163 = vpack.c.bf16 %v1127, %v1124
    %v1164 = vpack.c.bf16 %v1135, %v1132
    %v1165 = vpack.c.bf16 %v1143, %v1140
    %v1166 = vpack.c.bf16 %v1151, %v1148
    %v1180 = vunpack.c.l.b16 %v1154
    %v1181 = vunpack.c.h.b16 %v1154
    %v1182 = vunpack.c.l.b16 %v1155
    %v1183 = vunpack.c.h.b16 %v1155
    %v1184 = vunpack.c.l.b16 %v1156
    %v1185 = vunpack.c.h.b16 %v1156
    %v1186 = vunpack.c.l.b16 %v1157
    %v1187 = vunpack.c.h.b16 %v1157
    %v1188 = vunpack.c.l.b16 %v1158
    %v1189 = vunpack.c.h.b16 %v1158
    %v1190 = vunpack.c.l.b16 %v1159
    %v1191 = vunpack.c.h.b16 %v1159
    %v1192 = vunpack.c.l.b16 %v1160
    %v1193 = vunpack.c.h.b16 %v1160
    %v1194 = vunpack.c.l.b16 %v1161
    %v1195 = vunpack.c.h.b16 %v1161
    %v1196 = vunpack.c.l.b16 %v1162
    %v1197 = vunpack.c.h.b16 %v1162
    %v1198 = vunpack.c.l.b16 %v1163
    %v1199 = vunpack.c.h.b16 %v1163
    %v1200 = vunpack.c.l.b16 %v1164
    %v1201 = vunpack.c.h.b16 %v1164
    %v1202 = vunpack.c.l.b16 %v1165
    %v1203 = vunpack.c.h.b16 %v1165
    %v1204 = vunpack.c.l.b16 %v1166
    %v1205 = vunpack.c.h.b16 %v1166
    %v1206 = vpack.c.b16 %v1180, %v1180
    %v1207 = vpack.c.b16 %v1181, %v1181
    %v1208 = vpack.c.b16 %v1182, %v1182
    %v1209 = vpack.c.b16 %v1183, %v1183
    %v1210 = vpack.c.b16 %v1184, %v1184
    %v1211 = vpack.c.b16 %v1185, %v1185
    %v1212 = vpack.c.b16 %v1186, %v1186
    %v1213 = vpack.c.b16 %v1187, %v1187
    %v1214 = vpack.c.b16 %v1188, %v1188
    %v1215 = vpack.c.b16 %v1189, %v1189
    %v1216 = vpack.c.b16 %v1190, %v1190
    %v1217 = vpack.c.b16 %v1191, %v1191
    %v1218 = vpack.c.b16 %v1192, %v1192
    %v1219 = vpack.c.b16 %v1193, %v1193
    %v1220 = vpack.c.b16 %v1194, %v1194
    %v1221 = vpack.c.b16 %v1195, %v1195
    %v1222 = vpack.c.b16 %v1196, %v1196
    %v1223 = vpack.c.b16 %v1197, %v1197
    %v1224 = vpack.c.b16 %v1198, %v1198
    %v1225 = vpack.c.b16 %v1199, %v1199
    %v1226 = vpack.c.b16 %v1200, %v1200
    %v1227 = vpack.c.b16 %v1201, %v1201
    %v1228 = vpack.c.b16 %v1202, %v1202
    %v1229 = vpack.c.b16 %v1203, %v1203
    %v1230 = vpack.c.b16 %v1204, %v1204
    %v1231 = vpack.c.b16 %v1205, %v1205
    %1258 = vst [vmem:[%s7] sm:$0xf] %v1206
    %1259 = vst [vmem:[%s7 + $0x4] sm:$0xf] %v1207
    %1260 = vst [vmem:[%s7 + $0x8] sm:$0xf] %v1208
    %1261 = vst [vmem:[%s7 + $0xc] sm:$0xf] %v1209
    %1262 = vst [vmem:[%s7 + $0x10] sm:$0xf] %v1210
    %1263 = vst [vmem:[%s7 + $0x14] sm:$0xf] %v1211
    %1264 = vst [vmem:[%s7 + $0x18] sm:$0xf] %v1212
    %1265 = vst [vmem:[%s7 + $0x1c] sm:$0xf] %v1213
    %1266 = vst [vmem:[%s7 + $0x20] sm:$0xf] %v1214
    %1267 = vst [vmem:[%s7 + $0x24] sm:$0xf] %v1215
    %1268 = vst [vmem:[%s7 + $0x28] sm:$0xf] %v1216
    %1269 = vst [vmem:[%s7 + $0x2c] sm:$0xf] %v1217
    %1270 = vst [vmem:[%s7 + $0x30] sm:$0xf] %v1218
    %1271 = vst [vmem:[%s7 + $0x34] sm:$0xf] %v1219
    %1272 = vst [vmem:[%s7 + $0x38] sm:$0xf] %v1220
    %1273 = vst [vmem:[%s7 + $0x3c] sm:$0xf] %v1221
    %1274 = vst [vmem:[%s7 + $0x40] sm:$0xf] %v1222
    %1275 = vst [vmem:[%s7 + $0x44] sm:$0xf] %v1223
    %1276 = vst [vmem:[%s7 + $0x48] sm:$0xf] %v1224
    %1277 = vst [vmem:[%s7 + $0x4c] sm:$0xf] %v1225
    %1278 = vst [vmem:[%s7 + $0x50] sm:$0xf] %v1226
    %1279 = vst [vmem:[%s7 + $0x54] sm:$0xf] %v1227
    %1280 = vst [vmem:[%s7 + $0x58] sm:$0xf] %v1228
    %1281 = vst [vmem:[%s7 + $0x5c] sm:$0xf] %v1229
    %1282 = vst [vmem:[%s7 + $0x60] sm:$0xf] %v1230
    %1283 = vst [vmem:[%s7 + $0x64] sm:$0xf] %v1231
    // Predicated region
    $region34: #{deep_q_network.1} parent=1 // pred_check
      _
    $region35: #{deep_q_network.1} parent=1 // pred_check_branch
      %1285 = sbr.rel (0) target = $region37
    $region36: #{deep_q_network.1} parent=1 // pred_region
      _
    $region37: #{deep_q_network.1} parent=1 // pred_fallthru
      _
    // Predicated region
    $region38: #{deep_q_network.1} parent=1 // pred_check
      _
    $region39: #{deep_q_network.1} parent=1 // pred_check_branch
      %1287 = sbr.rel (0) target = $region41
    $region40: #{deep_q_network.1} parent=1 // pred_region
      _
    $region41: #{deep_q_network.1} parent=1 // pred_fallthru
      _
    %1288 = vsyncpa [#allocation3], 1

</llo_original>
